<compile_context>
chip_gen: v7x
topology: tpu7x:2x2x1
jax: 0.10.0
libtpu: 0.0.40
codegen_flags: <defaults>
</compile_context>

<pallas_src>
import math

import jax
import jax.numpy as jnp
from jax.experimental import pallas as pl
from jax.experimental.pallas import tpu as pltpu


def _add_pe_kernel(x_ref, pe_ref, o_ref):
    # x_ref : (ts, batch, d_model)
    # pe_ref: (ts, 1,     d_model)  -> broadcast over the batch (sublane) axis
    o_ref[...] = (x_ref[...] + pe_ref[...]).astype(o_ref.dtype)


def make_positional_encoding(d_model, max_len=1024, scale_factor=1.0,
                             dtype=jnp.float32):
    """Reproduces the torch buffer construction exactly (for even d_model)."""
    position = jnp.arange(0, max_len, dtype=jnp.float32)[:, None]           # (L, 1)
    div_term = jnp.exp(
        jnp.arange(0, d_model, 2, dtype=jnp.float32)
        * (-math.log(10000.0) / d_model))                                   # (ceil(D/2),)
    angles = position * div_term                                            # (L, ceil(D/2))
    pe = jnp.zeros((max_len, d_model), dtype=jnp.float32)
    pe = pe.at[:, 0::2].set(jnp.sin(angles))
    # Guard the latent odd-d_model bug in the torch original: cos gets floor(D/2) cols.
    pe = pe.at[:, 1::2].set(jnp.cos(angles[:, : d_model // 2]))
    # pe.unsqueeze(0).transpose(0, 1) -> (max_len, 1, d_model)
    pe = scale_factor * pe[None, :, :].transpose(1, 0, 2)
    return pe.astype(dtype)


def _choose_seq_tile(seq_len, batch, d_model, itemsize,
                     target_bytes=2 * 1024 * 1024):
    """Largest seq tile whose x-block is ~target_bytes (VMEM-safe on v5e..v7x)."""
    row_bytes = batch * d_model * itemsize
    ts = max(1, target_bytes // row_bytes)
    if ts >= 8:
        ts -= ts % 8          # keep the leading dim a friendly multiple of 8
    return int(min(ts, seq_len))


def fixed_positional_encoding(x, pe, *, seq_tile=None):
    """x: (seq_len, batch, d_model); pe: (max_len, 1, d_model)."""
    seq_len, batch, d_model = x.shape
    max_len = pe.shape[0]
    if seq_len > max_len:
        raise ValueError(f"seq_len={seq_len} exceeds max_len={max_len}")
    if pe.shape[-1] != d_model:
        raise ValueError("pe d_model does not match x d_model")

    # Match dtypes so pe DMA bytes are minimal and the add is a single VPU op.
    if pe.dtype != x.dtype:
        pe = pe.astype(x.dtype)

    ts = seq_tile if seq_tile is not None else _choose_seq_tile(
        seq_len, batch, d_model, jnp.dtype(x.dtype).itemsize)
    ts = int(min(ts, seq_len))
    grid = (pl.cdiv(seq_len, ts),)

    return pl.pallas_call(
        _add_pe_kernel,
        out_shape=jax.ShapeDtypeStruct((seq_len, batch, d_model), x.dtype),
        grid=grid,
        in_specs=[
            # x: tiled along seq; last two dims are the full (batch, d_model).
            pl.BlockSpec((ts, batch, d_model), lambda i: (i, 0, 0)),
            # pe: same seq tile, batch-broadcast inside the kernel.  Indexing
            # the full (max_len, 1, d_model) table implements pe[:seq_len]
            # without a wrapper-side slice copy.
            pl.BlockSpec((ts, 1, d_model), lambda i: (i, 0, 0)),
        ],
        out_specs=pl.BlockSpec((ts, batch, d_model), lambda i: (i, 0, 0)),
        # In-place add: reuse x's buffer for the output (copy is inserted
        # automatically when the caller does not donate x).
        input_output_aliases={0: 0},
        compiler_params=pltpu.CompilerParams(
            dimension_semantics=("parallel",)),
    )(x, pe)


if __name__ == "__main__":
    # --- small demo shape consistent with the module convention -------------
    SEQ, BATCH, D_MODEL, MAX_LEN = 8, 2, 32, 1024

    key = jax.random.PRNGKey(0)
    x = jax.random.normal(key, (SEQ, BATCH, D_MODEL), dtype=jnp.float32)
    pe = make_positional_encoding(D_MODEL, max_len=MAX_LEN, scale_factor=1.0)

    # Reference computed before the kernel call (x may be aliased in-place).
    ref = x + pe[:SEQ, :, :]

    out = jax.block_until_ready(fixed_positional_encoding(x, pe))
    assert out.shape == (SEQ, BATCH, D_MODEL)
    assert jnp.allclose(out, ref, atol=1e-6, rtol=1e-6)

    # --- production-shaped check: tiled grid + bf16 dtype-matched pe --------
    S2, B2, D2 = 1024, 8, 256
    x2 = jax.random.normal(jax.random.PRNGKey(0), (S2, B2, D2),
                           dtype=jnp.float32).astype(jnp.bfloat16)
    pe2 = make_positional_encoding(D2, max_len=MAX_LEN, scale_factor=1.0)
    ref2 = x2 + pe2[:S2, :, :].astype(jnp.bfloat16)

    out2 = jax.block_until_ready(fixed_positional_encoding(x2, pe2))
    assert out2.shape == (S2, B2, D2)
    assert jnp.allclose(out2.astype(jnp.float32), ref2.astype(jnp.float32),
                        atol=2e-2, rtol=2e-2)

    print("KERNEL_OK")
</pallas_src>

<mosaic_0001>
module attributes {stable_mosaic.version = 11 : i64} {
  func.func @_add_pe_kernel(%arg0: i32, %arg1: memref<8x2x32xf32, #tpu.memory_space<vmem>>, %arg2: memref<8x1x32xf32, #tpu.memory_space<vmem>>, %arg3: memref<8x2x32xf32, #tpu.memory_space<vmem>>) attributes {dimension_semantics = [#tpu.dimension_semantics<parallel>], iteration_bounds = array<i64: 1>, scalar_prefetch = 0 : i64, scratch_operands = 0 : i64, tpu.core_type = #tpu.core_type<tc>, window_params = [{transform_indices = @transform_0, window_bounds = array<i64: 8, 2, 32>}, {transform_indices = @transform_1, window_bounds = array<i64: 8, 1, 32>}, {transform_indices = @transform_2, window_bounds = array<i64: 8, 2, 32>}]} {
    %c0 = arith.constant 0 : index
    %c0_0 = arith.constant 0 : index
    %c0_1 = arith.constant 0 : index
    %0 = vector.load %arg1[%c0, %c0_0, %c0_1] : memref<8x2x32xf32, #tpu.memory_space<vmem>>, vector<8x2x32xf32>
    %c0_2 = arith.constant 0 : index
    %c0_3 = arith.constant 0 : index
    %c0_4 = arith.constant 0 : index
    %1 = vector.load %arg2[%c0_2, %c0_3, %c0_4] : memref<8x1x32xf32, #tpu.memory_space<vmem>>, vector<8x1x32xf32>
    %2 = vector.broadcast %1 : vector<8x1x32xf32> to vector<8x2x32xf32>
    %3 = arith.addf %0, %2 : vector<8x2x32xf32>
    %c0_5 = arith.constant 0 : index
    %c0_6 = arith.constant 0 : index
    %c0_7 = arith.constant 0 : index
    %4 = vector.load %arg3[%c0_5, %c0_6, %c0_7] : memref<8x2x32xf32, #tpu.memory_space<vmem>>, vector<8x2x32xf32>
    tpu.vector_store %arg3[%c0_5, %c0_6, %c0_7], %3 {strides = array<i32>} : memref<8x2x32xf32, #tpu.memory_space<vmem>>, vector<8x2x32xf32>,
    return
  }
  func.func @transform_0(%arg0: i32) -> (i32, i32, i32) {
    %c0_i32 = arith.constant 0 : i32
    %c0_i32_0 = arith.constant 0 : i32
    %c0_i32_1 = arith.constant 0 : i32
    return %arg0, %c0_i32, %c0_i32_0 : i32, i32, i32
  }
  func.func @transform_1(%arg0: i32) -> (i32, i32, i32) {
    %c0_i32 = arith.constant 0 : i32
    %c0_i32_0 = arith.constant 0 : i32
    %c0_i32_1 = arith.constant 0 : i32
    return %arg0, %c0_i32, %c0_i32_0 : i32, i32, i32
  }
  func.func @transform_2(%arg0: i32) -> (i32, i32, i32) {
    %c0_i32 = arith.constant 0 : i32
    %c0_i32_0 = arith.constant 0 : i32
    %c0_i32_1 = arith.constant 0 : i32
    return %arg0, %c0_i32, %c0_i32_0 : i32, i32, i32
  }
}

</mosaic_0001>

<llo_original>
// kernel: tpu_custom_call.1
$region0: #{tpu_custom_call.1}
  #allocation0 [shape = 'u32[]', space=smem, size = 0x4, offset = 0x4, fixed_abs, tag = 'smem constant byte address 0x4 - core index']
  #allocation1 [shape = 'u32[144,128]{1,0:T(1,128)}', space=vmem, size = 0x12000, scoped, tag = 'internal scratch']
  %s0 = inlined_call_operand.hbm [shape: f32[8,2,32], index: 0, kind: input, shape index: {}, may-alias: {0,2}]
  %s1 = inlined_call_operand.vmem [shape: f32[1024,1,32], index: 1, kind: input, shape index: {}]
  %s2 = inlined_call_operand.hbm [shape: f32[8,2,32], index: 2, kind: output, shape index: {}, may-alias: {0,2}]
  %s3 = sld [smem:[#allocation0]]
  $region22: #{tpu_custom_call.1} parent=0
    _
  %s5 = ssub.s32 1, %s3
  %s6 = scalar_select 0, %s5, %s3
  $region1: #{tpu_custom_call.1} parent=0
    #allocation2 [shape = 'u8[8192]{0}', space=vmem, size = 0x2000, scoped, tag = 'input window, operand 0, single buffered']
    #allocation3 [shape = 's32[1]{0}', space=sflag, size = 0x4, scoped, tag = 'scoped memory for tpu_custom_call.1']
    #allocation4 [shape = 's32[1]{0}', space=sflag, size = 0x4, scoped, tag = 'scoped memory for tpu_custom_call.1']
    #allocation5 [shape = 'u8[8192]{0}', space=vmem, size = 0x2000, scoped, tag = 'output window, operand 0, single buffered']
    %7 = vsyncpa [#allocation3], 0
    %8 = vsyncpa [#allocation4], 0
    // Predicated region
    $region2: #{tpu_custom_call.1} parent=1 // pred_check
      _
    $region3: #{tpu_custom_call.1} parent=1 // pred_check_branch
      %10 = sbr.rel (0) target = $region5
    $region4: #{tpu_custom_call.1} parent=1 // pred_region
      %s12 = ssub.s32 256, 256
      %13 = vsyncadd [#allocation3], %s12
      %s14 = sshll.u32 [#allocation2], 4
      %s15 = int_to_ptr.vmem [resolvable:$true] %s14
      %20 = dma.hbm_to_vmem [thread:$0]  %s0, 256, %s15, [#allocation3], 32, 32, 2
    $region5: #{tpu_custom_call.1} parent=1 // pred_fallthru
      _
    // Predicated region
    $region6: #{tpu_custom_call.1} parent=1 // pred_check
      _
    $region7: #{tpu_custom_call.1} parent=1 // pred_check_branch
      %22 = sbr.rel (0) target = $region9
    $region8: #{tpu_custom_call.1} parent=1 // pred_region
      _
    $region9: #{tpu_custom_call.1} parent=1 // pred_fallthru
      _
    // Predicated region
    $region10: #{tpu_custom_call.1} parent=1 // pred_check
      _
    $region11: #{tpu_custom_call.1} parent=1 // pred_check_branch
      %24 = sbr.rel (0) target = $region13
    $region12: #{tpu_custom_call.1} parent=1 // pred_region
      %25 = dma.done [#allocation3], 256
    $region13: #{tpu_custom_call.1} parent=1 // pred_fallthru
      _
    %v26 = vld [vmem:[#allocation2] sm:$0x3]
    %v27 = vld [vmem:[#allocation2 + $0x2] sm:$0x3]
    %v28 = vld [vmem:[#allocation2 + $0x4] sm:$0x3]
    %v29 = vld [vmem:[#allocation2 + $0x6] sm:$0x3]
    %v30 = vld [vmem:[#allocation2 + $0x8] sm:$0x3]
    %v31 = vld [vmem:[#allocation2 + $0xa] sm:$0x3]
    %v32 = vld [vmem:[#allocation2 + $0xc] sm:$0x3]
    %v33 = vld [vmem:[#allocation2 + $0xe] sm:$0x3]
    %v34 = vld [vmem:[%s1] sm:$0x1]
    %v35 = vld [vmem:[%s1 + $0x1] sm:$0x1]
    %v36 = vld [vmem:[%s1 + $0x2] sm:$0x1]
    %v37 = vld [vmem:[%s1 + $0x3] sm:$0x1]
    %v38 = vld [vmem:[%s1 + $0x4] sm:$0x1]
    %v39 = vld [vmem:[%s1 + $0x5] sm:$0x1]
    %v40 = vld [vmem:[%s1 + $0x6] sm:$0x1]
    %v41 = vld [vmem:[%s1 + $0x7] sm:$0x1]
    %v50 = vlaneseq
    %v51 = vshrl.u32 %v50, 7
    %v52 = vsub.s32 0, %v51
    %v53 = vrot.slane %v34, %v52
    %v54 = vlaneseq
    %v55 = vshrl.u32 %v54, 7
    %v56 = vsub.s32 0, %v55
    %v57 = vrot.slane %v35, %v56
    %v58 = vlaneseq
    %v59 = vshrl.u32 %v58, 7
    %v60 = vsub.s32 0, %v59
    %v61 = vrot.slane %v36, %v60
    %v62 = vlaneseq
    %v63 = vshrl.u32 %v62, 7
    %v64 = vsub.s32 0, %v63
    %v65 = vrot.slane %v37, %v64
    %v66 = vlaneseq
    %v67 = vshrl.u32 %v66, 7
    %v68 = vsub.s32 0, %v67
    %v69 = vrot.slane %v38, %v68
    %v70 = vlaneseq
    %v71 = vshrl.u32 %v70, 7
    %v72 = vsub.s32 0, %v71
    %v73 = vrot.slane %v39, %v72
    %v74 = vlaneseq
    %v75 = vshrl.u32 %v74, 7
    %v76 = vsub.s32 0, %v75
    %v77 = vrot.slane %v40, %v76
    %v78 = vlaneseq
    %v79 = vshrl.u32 %v78, 7
    %v80 = vsub.s32 0, %v79
    %v81 = vrot.slane %v41, %v80
    %v90 = vadd.f32 %v26, %v53
    %v91 = vadd.f32 %v27, %v57
    %v92 = vadd.f32 %v28, %v61
    %v93 = vadd.f32 %v29, %v65
    %v94 = vadd.f32 %v30, %v69
    %v95 = vadd.f32 %v31, %v73
    %v96 = vadd.f32 %v32, %v77
    %v97 = vadd.f32 %v33, %v81
    %vm98 = vcmask 254976
    %99 = vst.msk [vmem:[#allocation5] sm:$0x3] %vm98, %v90
    %100 = vst.msk [vmem:[#allocation5 + $0x2] sm:$0x3] %vm98, %v91
    %101 = vst.msk [vmem:[#allocation5 + $0x4] sm:$0x3] %vm98, %v92
    %102 = vst.msk [vmem:[#allocation5 + $0x6] sm:$0x3] %vm98, %v93
    %103 = vst.msk [vmem:[#allocation5 + $0x8] sm:$0x3] %vm98, %v94
    %104 = vst.msk [vmem:[#allocation5 + $0xa] sm:$0x3] %vm98, %v95
    %105 = vst.msk [vmem:[#allocation5 + $0xc] sm:$0x3] %vm98, %v96
    %106 = vst.msk [vmem:[#allocation5 + $0xe] sm:$0x3] %vm98, %v97
    // Predicated region
    $region14: #{tpu_custom_call.1} parent=1 // pred_check
      _
    $region15: #{tpu_custom_call.1} parent=1 // pred_check_branch
      %108 = sbr.rel (0) target = $region17
    $region16: #{tpu_custom_call.1} parent=1 // pred_region
      %s110 = ssub.s32 256, 256
      %111 = vsyncadd [#allocation4], %s110
      %s112 = sshll.u32 [#allocation5], 4
      %s113 = int_to_ptr.vmem [resolvable:$true] %s112
      %118 = dma.vmem_to_hbm [thread:$0]  %s113, 256, %s2, [#allocation4], 32, 32, 2
    $region17: #{tpu_custom_call.1} parent=1 // pred_fallthru
      _
    // Predicated region
    $region18: #{tpu_custom_call.1} parent=1 // pred_check
      _
    $region19: #{tpu_custom_call.1} parent=1 // pred_check_branch
      %120 = sbr.rel (0) target = $region21
    $region20: #{tpu_custom_call.1} parent=1 // pred_region
      %121 = dma.done [#allocation4], 256
    $region21: #{tpu_custom_call.1} parent=1 // pred_fallthru
      _
    %122 = vsyncpa [#allocation3], 1
    %123 = vsyncpa [#allocation4], 1

</llo_original>
